<compile_context>
chip_gen: v7x
topology: tpu7x:2x2x1
jax: 0.10.0
libtpu: 0.0.40
codegen_flags: <defaults>
</compile_context>

<pallas_src>
import math

import jax
import jax.numpy as jnp
from jax import lax
from jax.experimental import pallas as pl
from jax.experimental.pallas import tpu as pltpu


_TILE_BUDGET_BYTES = 6 * 1024 * 1024     # per tile; x4 = in+out, double-buffered
_VMEM_LIMIT_BYTES = 32 * 1024 * 1024     # scoped-VMEM request (safe on v5e/v6e/v7x)


def _cdiv(a, b):
    return -(-a // b)


def _round_up(n, m):
    return _cdiv(n, m) * m


def _sublane_pack(dtype):
    # Rows packed per 32-bit sublane cell: 8 (f32), 16 (bf16), 32 (int8/fp8).
    return max(8, 32 // max(jnp.dtype(dtype).itemsize, 1))


def _pick_tile_rows(total_rows, padded_row_bytes, row_align):
    """Largest row-tile whose double-buffered in+out copies fit the ~6 MiB/tile
    budget, while keeping >= 4 grid steps (so each of the two v7x TensorCores
    gets >= 2 pipelined steps) whenever every step can still move >= row_align
    rows, preferring an even step count.  Non-boundary tiles stay aligned to
    the sublane packing so stores are unmasked on the sublane axis."""
    if total_rows <= 0:
        return 1
    cap_bytes = max(1, _TILE_BUDGET_BYTES // max(padded_row_bytes, 1))
    cap_steps = max(_cdiv(total_rows, 4), row_align)
    cap = min(cap_bytes, cap_steps, total_rows)
    cap = max(cap, min(row_align, total_rows))
    if cap < total_rows:
        cap = max(row_align, (cap // row_align) * row_align)
        cap = min(cap, total_rows)
    steps = _cdiv(total_rows, cap)
    if steps > 2 and steps % 2 == 1:
        alt = max(row_align, _round_up(_cdiv(total_rows, steps + 1), row_align))
        alt = min(alt, cap)
        if _cdiv(total_rows, alt) % 2 == 0:
            cap = alt
    return max(1, cap)


def _pos_enc_kernel_flat(x_ref, freq_ref, phase_ref, o_ref):
    # x_ref/o_ref: (TR, B*D) tile of the (S, B*D) view -- one row == one
    # sequence position (fully dense sublane/lane layout even for tiny B).
    # freq_ref/phase_ref: (1, B*D) per-lane constants (inv_freq tiled over B).
    tr, bd = x_ref.shape
    pos = (lax.broadcasted_iota(jnp.int32, (tr, bd), 0)
           + pl.program_id(0) * tr).astype(jnp.float32)
    # pe[s, 2k] = sin(s*f_k); pe[s, 2k+1] = cos(s*f_k) = sin(s*f_k + pi/2)
    pe = jnp.sin(pos * freq_ref[...] + phase_ref[...])        # f32, dense
    o_ref[...] = (x_ref[...] + pe).astype(o_ref.dtype)        # add in f32


def _pos_enc_kernel_seq(x_ref, freq_ref, phase_ref, o_ref):
    # x_ref/o_ref: (TS, B, D) tile.  freq_ref/phase_ref: (1, 1, D).
    # pe is batch-free: generated at (TS, 1, D) and broadcast over the batch
    # sublanes inside the fused add (EUP/VPU work does not scale with B).
    ts = x_ref.shape[0]
    d = x_ref.shape[2]
    pos = (lax.broadcasted_iota(jnp.int32, (ts, 1, d), 0)
           + pl.program_id(0) * ts).astype(jnp.float32)
    pe = jnp.sin(pos * freq_ref[...] + phase_ref[...])        # f32 (TS, 1, D)
    o_ref[...] = (x_ref[...] + pe).astype(o_ref.dtype)        # add in f32


def positional_encoding(x, *, tile_rows=None):
    """x: (S, B, D) seq-first array.  Returns x + pe[:S] (pe broadcast over B).

    `tile_rows` optionally overrides the auto-picked tile size (rows = sequence
    positions).  For the small-batch flattened path it should be a multiple of
    the sublane packing (8 f32 / 16 bf16) unless it equals S.
    """
    S, B, D = x.shape
    if D % 2 != 0:
        raise ValueError("d_model must be even (as in the PyTorch module)")
    itemsize = jnp.dtype(x.dtype).itemsize
    pack = _sublane_pack(x.dtype)

    # Tiny per-feature constants, computed once outside the kernel.
    d_idx = jnp.arange(D, dtype=jnp.int32)
    pair = (d_idx // 2).astype(jnp.float32)                  # k for features 2k, 2k+1
    # div_term[k] = exp(2k * (-ln(10000) / d_model))
    inv_freq = jnp.exp(pair * jnp.float32(-2.0 * math.log(10000.0) / D))
    phase = jnp.where((d_idx % 2) == 1,
                      jnp.float32(math.pi / 2.0), jnp.float32(0.0))

    cost = pl.CostEstimate(
        flops=int(3 * S * B * D),
        transcendentals=int(S * D if B >= pack else S * B * D),
        bytes_accessed=int(2 * S * B * D * itemsize))

    if B >= pack:
        # ---- Seq-tiled (TS, B, D) path: pe shared across the batch. ----
        row_bytes = _round_up(B, pack) * _round_up(D, 128) * itemsize
        ts = tile_rows if tile_rows is not None else _pick_tile_rows(S, row_bytes, 1)
        ts = max(1, min(int(ts), S))
        vmem_limit = int(min(64 * 2 ** 20,
                             max(_VMEM_LIMIT_BYTES, 4 * ts * row_bytes + 2 * 2 ** 20)))
        x_spec = pl.BlockSpec((ts, B, D), lambda i: (i, 0, 0))
        row_spec = pl.BlockSpec((1, 1, D), lambda i: (0, 0, 0))
        return pl.pallas_call(
            _pos_enc_kernel_seq,
            out_shape=jax.ShapeDtypeStruct((S, B, D), x.dtype),
            grid_spec=pltpu.PrefetchScalarGridSpec(
                num_scalar_prefetch=0,
                grid=(_cdiv(S, ts),),
                in_specs=[x_spec, row_spec, row_spec],
                out_specs=x_spec),
            compiler_params=pltpu.CompilerParams(
                dimension_semantics=("parallel",),
                vmem_limit_bytes=vmem_limit),
            cost_estimate=cost,
        )(x, inv_freq.reshape(1, 1, D), phase.reshape(1, 1, D))

    # ---- Small batch: flatten to (S, B*D) (free reshape) for dense layout. ----
    BD = B * D
    x2 = x.reshape(S, BD)
    freq_row = jnp.tile(inv_freq, B).reshape(1, BD)
    phase_row = jnp.tile(phase, B).reshape(1, BD)
    row_bytes = _round_up(BD, 128) * itemsize
    tr = tile_rows if tile_rows is not None else _pick_tile_rows(S, row_bytes, pack)
    tr = max(1, min(int(tr), S))
    vmem_limit = int(min(64 * 2 ** 20,
                         max(_VMEM_LIMIT_BYTES,
                             4 * _round_up(tr, pack) * row_bytes + 2 * 2 ** 20)))
    x_spec = pl.BlockSpec((tr, BD), lambda i: (i, 0))
    row_spec = pl.BlockSpec((1, BD), lambda i: (0, 0))
    out2 = pl.pallas_call(
        _pos_enc_kernel_flat,
        out_shape=jax.ShapeDtypeStruct((S, BD), x.dtype),
        grid_spec=pltpu.PrefetchScalarGridSpec(
            num_scalar_prefetch=0,
            grid=(_cdiv(S, tr),),
            in_specs=[x_spec, row_spec, row_spec],
            out_specs=x_spec),
        compiler_params=pltpu.CompilerParams(
            dimension_semantics=("parallel",),
            vmem_limit_bytes=vmem_limit),
        cost_estimate=cost,
    )(x2, freq_row, phase_row)
    return out2.reshape(S, B, D)


def _reference(x):
    """Pure-JAX reference mirroring the PyTorch buffer construction."""
    S, B, D = x.shape
    position = jnp.arange(S, dtype=jnp.float32)[:, None]                 # (S, 1)
    div_term = jnp.exp(jnp.arange(0, D, 2, dtype=jnp.float32)
                       * (-math.log(10000.0) / D))                       # (D/2,)
    pe = jnp.zeros((S, D), jnp.float32)
    pe = pe.at[:, 0::2].set(jnp.sin(position * div_term))
    pe = pe.at[:, 1::2].set(jnp.cos(position * div_term))
    return (x.astype(jnp.float32) + pe[:, None, :]).astype(x.dtype)


if __name__ == "__main__":
    def _check(out, x, atol, rtol):
        ref = _reference(x)
        assert out.shape == x.shape and out.dtype == x.dtype
        assert jnp.allclose(out.astype(jnp.float32), ref.astype(jnp.float32),
                            atol=atol, rtol=rtol), "mismatch vs reference"

    # 1) Module-like small shape (seq=8, batch=2, d_model=32): small-batch
    #    flattened (S, B*D) path, single block.
    x1 = jax.random.normal(jax.random.PRNGKey(0), (8, 2, 32), dtype=jnp.float32)
    _check(jax.block_until_ready(positional_encoding(x1)), x1, 2e-5, 2e-5)

    # 2) Multi-step ragged grid on the flattened path (S=40 with 16-row tiles:
    #    3 steps, masked boundary block).
    x2 = jax.random.normal(jax.random.PRNGKey(1), (40, 2, 32), dtype=jnp.float32)
    _check(jax.block_until_ready(positional_encoding(x2, tile_rows=16)),
           x2, 2e-5, 2e-5)

    # 3) Batch >= sublane packing: seq-tiled (TS, B, D) path with batch-free pe,
    #    ragged last block (S=20, 8-row tiles).
    x3 = jax.random.normal(jax.random.PRNGKey(2), (20, 8, 128), dtype=jnp.float32)
    _check(jax.block_until_ready(positional_encoding(x3, tile_rows=8)),
           x3, 2e-5, 2e-5)

    # 4) bf16 input: add performed in f32, single downcast at the store.
    x4 = jax.random.normal(jax.random.PRNGKey(3), (16, 2, 32),
                           dtype=jnp.float32).astype(jnp.bfloat16)
    _check(jax.block_until_ready(positional_encoding(x4)), x4, 5e-2, 5e-2)

    print("KERNEL_OK")
</pallas_src>

<mosaic_0001>
module attributes {stable_mosaic.version = 11 : i64} {
  func.func @_pos_enc_kernel_flat(%arg0: i32, %arg1: memref<8x64xf32, #tpu.memory_space<vmem>>, %arg2: memref<1x64xf32, #tpu.memory_space<vmem>>, %arg3: memref<1x64xf32, #tpu.memory_space<vmem>>, %arg4: memref<8x64xf32, #tpu.memory_space<vmem>>) attributes {dimension_semantics = [#tpu.dimension_semantics<parallel>], iteration_bounds = array<i64: 1>, scalar_prefetch = 0 : i64, scratch_operands = 0 : i64, tpu.core_type = #tpu.core_type<tc>, window_params = [{transform_indices = @transform_0, window_bounds = array<i64: 8, 64>}, {pipeline_mode = #tpu.pipeline_mode<synchronous>, transform_indices = @transform_1, window_bounds = array<i64: 1, 64>}, {pipeline_mode = #tpu.pipeline_mode<synchronous>, transform_indices = @transform_2, window_bounds = array<i64: 1, 64>}, {transform_indices = @transform_3, window_bounds = array<i64: 8, 64>}]} {
    %0 = tpu.iota {dimensions = array<i32: 0>} : vector<8x64xi32>
    %c8_i32 = arith.constant 8 : i32
    %1 = arith.muli %arg0, %c8_i32 : i32
    %2 = vector.broadcast %1 : i32 to vector<8x64xi32>
    %3 = arith.addi %0, %2 : vector<8x64xi32>
    %4 = arith.sitofp %3 : vector<8x64xi32> to vector<8x64xf32>
    %c0 = arith.constant 0 : index
    %c0_0 = arith.constant 0 : index
    %5 = vector.load %arg2[%c0, %c0_0] : memref<1x64xf32, #tpu.memory_space<vmem>>, vector<1x64xf32>
    %6 = vector.broadcast %5 : vector<1x64xf32> to vector<8x64xf32>
    %7 = arith.mulf %4, %6 : vector<8x64xf32>
    %c0_1 = arith.constant 0 : index
    %c0_2 = arith.constant 0 : index
    %8 = vector.load %arg3[%c0_1, %c0_2] : memref<1x64xf32, #tpu.memory_space<vmem>>, vector<1x64xf32>
    %9 = vector.broadcast %8 : vector<1x64xf32> to vector<8x64xf32>
    %10 = arith.addf %7, %9 : vector<8x64xf32>
    %11 = math.sin %10 : vector<8x64xf32>
    %c0_3 = arith.constant 0 : index
    %c0_4 = arith.constant 0 : index
    %12 = vector.load %arg1[%c0_3, %c0_4] : memref<8x64xf32, #tpu.memory_space<vmem>>, vector<8x64xf32>
    %13 = arith.addf %12, %11 : vector<8x64xf32>
    %c0_5 = arith.constant 0 : index
    %c0_6 = arith.constant 0 : index
    %14 = vector.load %arg4[%c0_5, %c0_6] : memref<8x64xf32, #tpu.memory_space<vmem>>, vector<8x64xf32>
    tpu.vector_store %arg4[%c0_5, %c0_6], %13 {strides = array<i32>} : memref<8x64xf32, #tpu.memory_space<vmem>>, vector<8x64xf32>,
    return
  }
  func.func @transform_0(%arg0: i32) -> (i32, i32) {
    %c0_i32 = arith.constant 0 : i32
    %c0_i32_0 = arith.constant 0 : i32
    return %arg0, %c0_i32 : i32, i32
  }
  func.func @transform_1(%arg0: i32) -> (i32, i32) {
    %c0_i32 = arith.constant 0 : i32
    %c0_i32_0 = arith.constant 0 : i32
    %c0_i32_1 = arith.constant 0 : i32
    return %c0_i32, %c0_i32_0 : i32, i32
  }
  func.func @transform_2(%arg0: i32) -> (i32, i32) {
    %c0_i32 = arith.constant 0 : i32
    %c0_i32_0 = arith.constant 0 : i32
    %c0_i32_1 = arith.constant 0 : i32
    return %c0_i32, %c0_i32_0 : i32, i32
  }
  func.func @transform_3(%arg0: i32) -> (i32, i32) {
    %c0_i32 = arith.constant 0 : i32
    %c0_i32_0 = arith.constant 0 : i32
    return %arg0, %c0_i32 : i32, i32
  }
}

</mosaic_0001>

<llo_original>
// kernel: tpu_custom_call.1
$region0: #{tpu_custom_call.1}
  #allocation0 [shape = 'u32[]', space=smem, size = 0x4, offset = 0x4, fixed_abs, tag = 'smem constant byte address 0x4 - core index']
  #allocation1 [shape = 'u32[144,128]{1,0:T(1,128)}', space=vmem, size = 0x12000, scoped, tag = 'internal scratch']
  %s0 = inlined_call_operand.hbm [shape: f32[8,64], index: 0, kind: input, shape index: {}]
  %s1 = inlined_call_operand.vmem [shape: f32[1,64], index: 1, kind: input, shape index: {}]
  %s2 = inlined_call_operand.vmem [shape: f32[1,64], index: 2, kind: input, shape index: {}]
  %s3 = inlined_call_operand.hbm [shape: f32[8,64], index: 3, kind: output, shape index: {}]
  %s4 = sld [smem:[#allocation0]]
  $region26: #{tpu_custom_call.1} parent=0
    _
  %s6 = ssub.s32 1, %s4
  %s7 = scalar_select 0, %s6, %s4
  $region1: #{tpu_custom_call.1} parent=0
    #allocation2 [shape = 'u8[4096]{0}', space=vmem, size = 0x1000, scoped, tag = 'input window, operand 0, single buffered']
    #allocation3 [shape = 's32[1]{0}', space=sflag, size = 0x4, scoped, tag = 'scoped memory for tpu_custom_call.1']
    #allocation4 [shape = 's32[1]{0}', space=sflag, size = 0x4, scoped, tag = 'scoped memory for tpu_custom_call.1']
    #allocation5 [shape = 'u8[4096]{0}', space=vmem, size = 0x1000, scoped, tag = 'output window, operand 0, single buffered']
    %8 = vsyncpa [#allocation3], 0
    %9 = vsyncpa [#allocation4], 0
    // Predicated region
    $region2: #{tpu_custom_call.1} parent=1 // pred_check
      _
    $region3: #{tpu_custom_call.1} parent=1 // pred_check_branch
      %11 = sbr.rel (0) target = $region5
    $region4: #{tpu_custom_call.1} parent=1 // pred_region
      %s13 = ssub.s32 128, 128
      %14 = vsyncadd [#allocation3], %s13
      %s16 = sshll.u32 [#allocation2], 4
      %s17 = int_to_ptr.vmem [resolvable:$true] %s16
      %19 = dma.hbm_to_vmem [thread:$0]  %s0, 128, %s17, [#allocation3]
    $region5: #{tpu_custom_call.1} parent=1 // pred_fallthru
      _
    // Predicated region
    $region6: #{tpu_custom_call.1} parent=1 // pred_check
      _
    $region7: #{tpu_custom_call.1} parent=1 // pred_check_branch
      %21 = sbr.rel (0) target = $region9
    $region8: #{tpu_custom_call.1} parent=1 // pred_region
      _
    $region9: #{tpu_custom_call.1} parent=1 // pred_fallthru
      _
    // Predicated region
    $region10: #{tpu_custom_call.1} parent=1 // pred_check
      _
    $region11: #{tpu_custom_call.1} parent=1 // pred_check_branch
      %23 = sbr.rel (0) target = $region13
    $region12: #{tpu_custom_call.1} parent=1 // pred_region
      _
    $region13: #{tpu_custom_call.1} parent=1 // pred_fallthru
      _
    // Predicated region
    $region14: #{tpu_custom_call.1} parent=1 // pred_check
      _
    $region15: #{tpu_custom_call.1} parent=1 // pred_check_branch
      %25 = sbr.rel (0) target = $region17
    $region16: #{tpu_custom_call.1} parent=1 // pred_region
      %26 = dma.done [#allocation3], 128
    $region17: #{tpu_custom_call.1} parent=1 // pred_fallthru
      _
    %v27 = vlaneseq
    %v28 = vshrl.u32 %v27, 7
    %s29 = smul.u32 0, 8
    %v30 = vstv %s29
    %v31 = vadd.s32 %v28, %v30
    %v32 = vcvt.s32.f32 %v31
    %v33 = vld [vmem:[%s1] sm:$0x1]
    %v35 = vlaneseq
    %v36 = vshrl.u32 %v35, 7
    %v37 = vsub.s32 0, %v36
    %v38 = vrot.slane %v33, %v37
    %v40 = vmul.f32 %v32, %v38
    %v41 = vld [vmem:[%s2] sm:$0x1]
    %v43 = vlaneseq
    %v44 = vshrl.u32 %v43, 7
    %v45 = vsub.s32 0, %v44
    %v46 = vrot.slane %v41, %v45
    %v48 = vadd.f32 %v40, %v46
    %v49 = vand.u32 2147483647, %v48
    %vm50 = vcmp.le.f32.partialorder %v49, 0.7853982
    %vm51 = vcmp.lt.s32.totalorder %v48, 0
    %v52 = vand.u32 %v48, 2139095040
    %v53 = vshrl.u32 %v52, 23
    %v54 = vsub.s32 %v53, 127
    %v55 = vand.u32 2147483647, %v48
    %v56 = vand.u32 %v55, 8388607
    %v57 = vor.u32 %v56, 8388608
    %v58 = vsub.s32 0, %v57
    %v59 = vadd.s32 %v54, 1
    %vm60 = vcmp.gt.s32.totalorder %v59, 0
    %v61 = vsel %vm60, %v59, 0
    %v62 = vshrl.u32 %v61, 5
    %v63 = vand.u32 %v61, 31
    %v64 = vsub.s32 32, %v63
    %v65 = vshrl.u32 683565275, %v64
    %v66 = vshll.u32 683565275, %v63
    %v67 = vshrl.u32 2475754826, %v64
    %v68 = vor.u32 %v66, %v67
    %v69 = vshll.u32 2475754826, %v63
    %v70 = vshrl.u32 2131351028, %v64
    %v71 = vor.u32 %v69, %v70
    %v72 = vshll.u32 2131351028, %v63
    %v73 = vshrl.u32 2102212464, %v64
    %v74 = vor.u32 %v72, %v73
    %v75 = vshll.u32 2102212464, %v63
    %v76 = vshrl.u32 920167782, %v64
    %v77 = vor.u32 %v75, %v76
    %v78 = vshll.u32 920167782, %v63
    %v79 = vshrl.u32 1326507024, %v64
    %v80 = vor.u32 %v78, %v79
    %vm81 = vcmp.lt.s32.totalorder %v62, 1
    %vm82 = vcmp.lt.s32.totalorder %v62, 2
    %vm83 = vcmp.lt.s32.totalorder %v62, 3
    %vm84 = vcmp.lt.s32.totalorder %v62, 4
    %v85 = vsel %vm81, %v65, %v68
    %v86 = vsel %vm84, %v74, 2102212464
    %v87 = vsel %vm83, %v71, %v86
    %v88 = vsel %vm82, %v85, %v87
    %v89 = vsel %vm81, %v68, %v71
    %v90 = vsel %vm84, %v77, 920167782
    %v91 = vsel %vm83, %v74, %v90
    %v92 = vsel %vm82, %v89, %v91
    %v93 = vsel %vm81, %v71, %v74
    %v94 = vsel %vm84, %v80, 1326507024
    %v95 = vsel %vm83, %v77, %v94
    %v96 = vsel %vm82, %v93, %v95
    %v97 = vshll.u32 %v57, 8
    %v98 = vmul.u32.u64.compose %v97, %v96
    %v99 = vextract.low.u32 %v98
    %v100 = vextract.high.u32 %v98
    %v101 = vmul.u32.u64.compose %v97, %v92
    %v102 = vextract.low.u32 %v101
    %v103 = vextract.high.u32 %v101
    %v104 = vmul.u32 %v97, %v88
    %v105 = vadd.s32 %v100, %v102
    %vm106 = vc.u32 %v100, %v102
    %v107 = vadd.s32 %v103, 1
    %v108 = vsel %vm106, %v107, %v103
    %v109 = vadd.s32 %v104, %v108
    %v110 = vadd.s32 %v109, 536870912
    %v111 = vshrl.u32 %v110, 30
    %v112 = vshll.u32 %v111, 30
    %v113 = vsub.s32 %v109, %v112
    %vm114 = vcmp.lt.s32.totalorder %v113, 0
    %v115 = vsub.s32 0, %v113
    %v116 = vsel %vm114, %v115, %v113
    %v117 = vclz %v116
    %v118 = vsub.s32 %v117, 2
    %vm119 = vcmp.gt.s32.totalorder 0, %v118
    %v120 = vsel %vm119, 0, %v118
    %v121 = vsub.s32 32, %v120
    %v122 = vshll.u32 %v113, %v120
    %v123 = vshrl.u32 %v105, %v121
    %v124 = vor.u32 %v122, %v123
    %v125 = vsub.s32 4294967266, %v120
    %v126 = vadd.s32 %v125, 127
    %v127 = vshll.u32 %v126, 23
    %v128 = vor.u32 4788187, %v127
    %v129 = vand.u32 2147483647, %v128
    %v131 = vcvt.s32.f32 %v124
    %v132 = vmul.f32 %v131, %v129
    %v133 = vxor.u32 %v132, 2147483648
    %v134 = vsel %vm51, %v133, %v132
    %v135 = vsub.s32 4, %v111
    %v136 = vsel %vm51, %v135, %v111
    %v137 = vsel %vm50, %v48, %v134
    %v138 = vsel %vm50, 0, %v136
    %v139 = vcosq.f32.pop %v137
    %v140 = vsinq.f32.pop %v137
    %vm141 = vweird.f32 %v48
    %v142 = vadd.s32 %v138, 3
    %v143 = vand.u32 %v142, 3
    %vm144 = vcmp.lt.s32.totalorder %v143, 2
    %vm145 = vcmp.eq.s32.totalorder %v143, 0
    %v146 = vxor.u32 %v140, 2147483648
    %v147 = vsel %vm145, %v139, %v146
    %vm148 = vcmp.eq.s32.totalorder %v143, 2
    %v149 = vxor.u32 %v139, 2147483648
    %v150 = vsel %vm148, %v149, %v140
    %v151 = vsel %vm144, %v147, %v150
    %v152 = vsel %vm141, nan, %v151
    %v153 = vld [vmem:[#allocation2] sm:$0xff]
    %v154 = vadd.f32 %v153, %v152
    %vm155 = vcmask 523264
    %156 = vst.msk [vmem:[#allocation5] sm:$0xff] %vm155, %v154
    // Predicated region
    $region18: #{tpu_custom_call.1} parent=1 // pred_check
      _
    $region19: #{tpu_custom_call.1} parent=1 // pred_check_branch
      %158 = sbr.rel (0) target = $region21
    $region20: #{tpu_custom_call.1} parent=1 // pred_region
      %s160 = ssub.s32 128, 128
      %161 = vsyncadd [#allocation4], %s160
      %s163 = sshll.u32 [#allocation5], 4
      %s164 = int_to_ptr.vmem [resolvable:$true] %s163
      %166 = dma.vmem_to_hbm [thread:$0]  %s164, 128, %s3, [#allocation4]
    $region21: #{tpu_custom_call.1} parent=1 // pred_fallthru
      _
    // Predicated region
    $region22: #{tpu_custom_call.1} parent=1 // pred_check
      _
    $region23: #{tpu_custom_call.1} parent=1 // pred_check_branch
      %168 = sbr.rel (0) target = $region25
    $region24: #{tpu_custom_call.1} parent=1 // pred_region
      %169 = dma.done [#allocation4], 128
    $region25: #{tpu_custom_call.1} parent=1 // pred_fallthru
      _
    %170 = vsyncpa [#allocation3], 1
    %171 = vsyncpa [#allocation4], 1

</llo_original>
